<compile_context>
chip_gen: v6e
topology: v6e:2x2x1
jax: 0.10.0
libtpu: 0.0.40
codegen_flags: <defaults>
</compile_context>

<pallas_src>
import functools

import jax
import jax.numpy as jnp
from jax.experimental import pallas as pl
from jax.experimental.pallas import tpu as pltpu


def _round_up(a, b):
    return ((a + b - 1) // b) * b


def _graphconv_kernel(x_row_ref, adj_ref, y_ref, w_root_ref, b_ref,
                      o_ref, acc_ref, *, resident_y, tk):
    k = pl.program_id(1)

    # Init: node term + bias, computed once per row tile (k == 0).
    @pl.when(k == 0)
    def _():
        acc_ref[...] = (
            jnp.dot(x_row_ref[...], w_root_ref[...],
                    preferred_element_type=jnp.float32)
            + b_ref[...]
        )

    # y = x @ W_rel was precomputed in the wrapper; grab this reduction slab.
    if resident_y:
        start = pl.multiple_of(k * tk, tk)
        y_blk = y_ref[pl.ds(start, tk), :]
    else:
        y_blk = y_ref[...]

    # adj ships as bf16 (exact for 0/1 entries); cast back to fp32 is bit-exact
    # and the VPU cast hides under the MXU work.
    adj_blk = adj_ref[...].astype(jnp.float32)
    acc_ref[...] += jnp.dot(adj_blk, y_blk, preferred_element_type=jnp.float32)

    # Finalize: single lane-dense store of the row tile.
    @pl.when(k == pl.num_programs(1) - 1)
    def _():
        o_ref[...] = acc_ref[...].astype(o_ref.dtype)


def _choose_tiles(n_pad, tm_max, tk_max):
    """Pick 128-multiple tiles that divide n_pad, clamped for small graphs.

    Keeps >= 2 row tiles when possible so v7x's two TensorCores both get work.
    """
    def largest(limit):
        t = 128
        for cand in (256, 512, 1024):
            if cand <= limit and n_pad % cand == 0:
                t = cand
        return t

    tk = largest(tk_max)
    tm = largest(tm_max)
    while tm > 128 and n_pad // tm < 2:
        tm //= 2
    return tm, tk


def graph_conv(x, adj, w_root_t, w_rel_t, b_rel, *,
               tm_max=512, tk_max=512,
               adj_in_bf16=True,
               y_resident_max_bytes=8 * 1024 * 1024):
    """x: [N, Fin], adj: [N, N], w_*_t: [Fin, Fout], b_rel: [1, Fout].

    adj_in_bf16=True is exact for 0/1 adjacency matrices; set False if adj
    carries arbitrary fp32 edge weights.
    """
    n, f_in = x.shape
    f_out = w_root_t.shape[1]
    assert adj.shape == (n, n)
    assert w_root_t.shape == (f_in, f_out) and w_rel_t.shape == (f_in, f_out)
    assert b_rel.shape == (1, f_out)

    # Pad node count only to a 128 multiple (no lcm inflation for small graphs)
    # and the feature dim to a lane-dense multiple of 128.  Zero padding is
    # exact: padded rows/cols contribute 0; padded rows get bias but are
    # sliced off below.
    n_pad = _round_up(n, 128)
    f_out_pad = _round_up(max(f_out, 128), 128)
    tm, tk = _choose_tiles(n_pad, tm_max, tk_max)

    x_p = jnp.pad(x, ((0, n_pad - n), (0, 0))).astype(jnp.float32)
    adj_p = jnp.pad(adj, ((0, n_pad - n), (0, n_pad - n)))
    adj_p = adj_p.astype(jnp.bfloat16 if adj_in_bf16 else jnp.float32)
    w_root_p = jnp.pad(w_root_t, ((0, 0), (0, f_out_pad - f_out))).astype(jnp.float32)
    w_rel_p = jnp.pad(w_rel_t, ((0, 0), (0, f_out_pad - f_out))).astype(jnp.float32)
    b_p = jnp.pad(b_rel, ((0, 0), (0, f_out_pad - f_out))).astype(jnp.float32)

    # Hoist the small [N, Fin] x [Fin, Fout] projection out of the streaming
    # kernel: computed exactly once here instead of once per row tile.
    y_p = jnp.dot(x_p, w_rel_p, precision=jax.lax.Precision.HIGHEST,
                  preferred_element_type=jnp.float32)

    # Keep y resident in VMEM (single DMA, constant block index) when it fits
    # a conservative budget; otherwise stream it per reduction slab.
    resident_y = 2 * n_pad * f_out_pad * 4 <= y_resident_max_bytes
    if resident_y:
        y_spec = pl.BlockSpec((n_pad, f_out_pad), lambda i, k: (0, 0))
    else:
        y_spec = pl.BlockSpec((tk, f_out_pad), lambda i, k: (k, 0))

    grid = (n_pad // tm, n_pad // tk)
    kernel = functools.partial(_graphconv_kernel, resident_y=resident_y, tk=tk)

    out_p = pl.pallas_call(
        kernel,
        out_shape=jax.ShapeDtypeStruct((n_pad, f_out_pad), x.dtype),
        grid_spec=pltpu.PrefetchScalarGridSpec(
            num_scalar_prefetch=0,
            grid=grid,
            in_specs=[
                pl.BlockSpec((tm, f_in), lambda i, k: (i, 0)),          # x rows (node term)
                pl.BlockSpec((tm, tk), lambda i, k: (i, k)),            # adj tile (bf16)
                y_spec,                                                 # x @ W_rel
                pl.BlockSpec((f_in, f_out_pad), lambda i, k: (0, 0)),   # W_root^T
                pl.BlockSpec((1, f_out_pad), lambda i, k: (0, 0)),      # bias
            ],
            out_specs=pl.BlockSpec((tm, f_out_pad), lambda i, k: (i, 0)),
            scratch_shapes=[pltpu.VMEM((tm, f_out_pad), jnp.float32)],
        ),
        compiler_params=pltpu.CompilerParams(
            dimension_semantics=("parallel", "arbitrary"),
            vmem_limit_bytes=32 * 1024 * 1024,
        ),
    )(x_p, adj_p, y_p, w_root_p, b_p)

    return out_p[:n, :f_out]


def graph_conv_ref(x, adj, w_root_t, w_rel_t, b_rel):
    # Mirrors the PyTorch op order exactly.
    node_term = x @ w_root_t
    agg = adj @ x
    rel_term = agg @ w_rel_t + b_rel
    return node_term + rel_term


if __name__ == "__main__":
    # Small-but-tileable shapes: 200 nodes (padded to 256), 32 -> 48 features.
    N, F_IN, F_OUT = 200, 32, 48

    key = jax.random.PRNGKey(0)
    k_x, k_adj, k_wr, k_wl, k_b = jax.random.split(key, 5)

    x = jax.random.normal(k_x, (N, F_IN), dtype=jnp.float32)
    # Binary adjacency -> the bf16 in-kernel representation is exact.
    adj = (jax.random.uniform(k_adj, (N, N)) < 0.3).astype(jnp.float32)

    # nn.Linear(F_IN, F_OUT).weight is [F_OUT, F_IN]; we carry the transpose.
    bound = 1.0 / float(F_IN) ** 0.5
    w_root_t = jax.random.uniform(k_wr, (F_IN, F_OUT), minval=-bound,
                                  maxval=bound, dtype=jnp.float32)
    w_rel_t = jax.random.uniform(k_wl, (F_IN, F_OUT), minval=-bound,
                                 maxval=bound, dtype=jnp.float32)
    b_rel = jax.random.uniform(k_b, (1, F_OUT), minval=-bound, maxval=bound,
                               dtype=jnp.float32)

    ref = graph_conv_ref(x, adj, w_root_t, w_rel_t, b_rel)

    # Path 1: VMEM-resident y (the common small/medium-graph path).
    out = jax.block_until_ready(graph_conv(x, adj, w_root_t, w_rel_t, b_rel))
    assert out.shape == (N, F_OUT)
    assert jnp.allclose(out, ref, atol=1e-4, rtol=1e-4), "mismatch (resident y)"

    # Path 2: streamed-y fallback (exercises the large-graph code path).
    out2 = jax.block_until_ready(
        graph_conv(x, adj, w_root_t, w_rel_t, b_rel, y_resident_max_bytes=0))
    assert jnp.allclose(out2, ref, atol=1e-4, rtol=1e-4), "mismatch (streamed y)"

    print("KERNEL_OK")
</pallas_src>

<mosaic_0001>
module attributes {stable_mosaic.version = 11 : i64} {
  func.func @_graphconv_kernel(%arg0: i32, %arg1: i32, %arg2: memref<128x32xf32, #tpu.memory_space<vmem>>, %arg3: memref<128x256xbf16, #tpu.memory_space<vmem>>, %arg4: memref<256x128xf32, #tpu.memory_space<vmem>>, %arg5: memref<32x128xf32, #tpu.memory_space<vmem>>, %arg6: memref<1x128xf32, #tpu.memory_space<vmem>>, %arg7: memref<128x128xf32, #tpu.memory_space<vmem>>, %arg8: memref<128x128xf32, #tpu.memory_space<vmem>>) attributes {dimension_semantics = [#tpu.dimension_semantics<parallel>, #tpu.dimension_semantics<arbitrary>], iteration_bounds = array<i64: 2, 1>, scalar_prefetch = 0 : i64, scratch_operands = 1 : i64, tpu.core_type = #tpu.core_type<tc>, window_params = [{transform_indices = @transform_0, window_bounds = array<i64: 128, 32>}, {transform_indices = @transform_1, window_bounds = array<i64: 128, 256>}, {pipeline_mode = #tpu.pipeline_mode<synchronous>, transform_indices = @transform_2, window_bounds = array<i64: 256, 128>}, {pipeline_mode = #tpu.pipeline_mode<synchronous>, transform_indices = @transform_3, window_bounds = array<i64: 32, 128>}, {pipeline_mode = #tpu.pipeline_mode<synchronous>, transform_indices = @transform_4, window_bounds = array<i64: 1, 128>}, {transform_indices = @transform_5, window_bounds = array<i64: 128, 128>}]} {
    %c0_i32 = arith.constant 0 : i32
    %0 = arith.cmpi eq, %arg1, %c0_i32 : i32
    %1 = arith.extui %0 : i1 to i32
    %c0_i32_0 = arith.constant 0 : i32
    %2 = arith.cmpi ne, %1, %c0_i32_0 : i32
    scf.if %2 {
      %c0_9 = arith.constant 0 : index
      %c0_10 = arith.constant 0 : index
      %16 = vector.load %arg2[%c0_9, %c0_10] : memref<128x32xf32, #tpu.memory_space<vmem>>, vector<128x32xf32>
      %c0_11 = arith.constant 0 : index
      %c0_12 = arith.constant 0 : index
      %17 = vector.load %arg5[%c0_11, %c0_12] : memref<32x128xf32, #tpu.memory_space<vmem>>, vector<32x128xf32>
      %cst_13 = arith.constant dense<0.000000e+00> : vector<128x128xf32>
      %18 = tpu.matmul %16, %17, %cst_13 {dimension_numbers = #tpu.dot_dimension_numbers<[1], [0], [0], [1], [0, 0, 1, 1], [], []>} : vector<128x32xf32>, vector<32x128xf32>, vector<128x128xf32> -> vector<128x128xf32>
      %c0_14 = arith.constant 0 : index
      %c0_15 = arith.constant 0 : index
      %19 = vector.load %arg6[%c0_14, %c0_15] : memref<1x128xf32, #tpu.memory_space<vmem>>, vector<1x128xf32>
      %20 = vector.broadcast %19 : vector<1x128xf32> to vector<128x128xf32>
      %21 = arith.addf %18, %20 : vector<128x128xf32>
      %c0_16 = arith.constant 0 : index
      %c0_17 = arith.constant 0 : index
      %22 = vector.load %arg8[%c0_16, %c0_17] : memref<128x128xf32, #tpu.memory_space<vmem>>, vector<128x128xf32>
      tpu.vector_store %arg8[%c0_16, %c0_17], %21 {strides = array<i32>} : memref<128x128xf32, #tpu.memory_space<vmem>>, vector<128x128xf32>,
    } else {
    }
    %c256_i32 = arith.constant 256 : i32
    %3 = arith.muli %arg1, %c256_i32 : i32
    %4 = tpu.assume_multiple %3, 256 : i32
    %5 = arith.index_cast %4 : i32 to index
    %c0 = arith.constant 0 : index
    %6 = vector.load %arg4[%5, %c0] : memref<256x128xf32, #tpu.memory_space<vmem>>, vector<256x128xf32>
    %c0_1 = arith.constant 0 : index
    %c0_2 = arith.constant 0 : index
    %7 = vector.load %arg3[%c0_1, %c0_2] : memref<128x256xbf16, #tpu.memory_space<vmem>>, vector<128x256xbf16>
    %8 = arith.extf %7 : vector<128x256xbf16> to vector<128x256xf32>
    %c0_3 = arith.constant 0 : index
    %c0_4 = arith.constant 0 : index
    %9 = vector.load %arg8[%c0_3, %c0_4] : memref<128x128xf32, #tpu.memory_space<vmem>>, vector<128x128xf32>
    %cst = arith.constant dense<0.000000e+00> : vector<128x128xf32>
    %10 = tpu.matmul %8, %6, %cst {dimension_numbers = #tpu.dot_dimension_numbers<[1], [0], [0], [1], [0, 0, 1, 1], [], []>} : vector<128x256xf32>, vector<256x128xf32>, vector<128x128xf32> -> vector<128x128xf32>
    %11 = arith.addf %9, %10 : vector<128x128xf32>
    %c0_5 = arith.constant 0 : index
    %c0_6 = arith.constant 0 : index
    %12 = vector.load %arg8[%c0_5, %c0_6] : memref<128x128xf32, #tpu.memory_space<vmem>>, vector<128x128xf32>
    tpu.vector_store %arg8[%c0_5, %c0_6], %11 {strides = array<i32>} : memref<128x128xf32, #tpu.memory_space<vmem>>, vector<128x128xf32>,
    %c0_i32_7 = arith.constant 0 : i32
    %13 = arith.cmpi eq, %arg1, %c0_i32_7 : i32
    %14 = arith.extui %13 : i1 to i32
    %c0_i32_8 = arith.constant 0 : i32
    %15 = arith.cmpi ne, %14, %c0_i32_8 : i32
    scf.if %15 {
      %c0_9 = arith.constant 0 : index
      %c0_10 = arith.constant 0 : index
      %16 = vector.load %arg8[%c0_9, %c0_10] : memref<128x128xf32, #tpu.memory_space<vmem>>, vector<128x128xf32>
      %c0_11 = arith.constant 0 : index
      %c0_12 = arith.constant 0 : index
      %17 = vector.load %arg7[%c0_11, %c0_12] : memref<128x128xf32, #tpu.memory_space<vmem>>, vector<128x128xf32>
      tpu.vector_store %arg7[%c0_11, %c0_12], %16 {strides = array<i32>} : memref<128x128xf32, #tpu.memory_space<vmem>>, vector<128x128xf32>,
    } else {
    }
    return
  }
  func.func @transform_0(%arg0: i32, %arg1: i32) -> (i32, i32) {
    %c0_i32 = arith.constant 0 : i32
    %c0_i32_0 = arith.constant 0 : i32
    return %arg0, %c0_i32 : i32, i32
  }
  func.func @transform_1(%arg0: i32, %arg1: i32) -> (i32, i32) {
    %c0_i32 = arith.constant 0 : i32
    return %arg0, %arg1 : i32, i32
  }
  func.func @transform_2(%arg0: i32, %arg1: i32) -> (i32, i32) {
    %c0_i32 = arith.constant 0 : i32
    %c0_i32_0 = arith.constant 0 : i32
    %c0_i32_1 = arith.constant 0 : i32
    return %c0_i32, %c0_i32_0 : i32, i32
  }
  func.func @transform_3(%arg0: i32, %arg1: i32) -> (i32, i32) {
    %c0_i32 = arith.constant 0 : i32
    %c0_i32_0 = arith.constant 0 : i32
    %c0_i32_1 = arith.constant 0 : i32
    return %c0_i32, %c0_i32_0 : i32, i32
  }
  func.func @transform_4(%arg0: i32, %arg1: i32) -> (i32, i32) {
    %c0_i32 = arith.constant 0 : i32
    %c0_i32_0 = arith.constant 0 : i32
    %c0_i32_1 = arith.constant 0 : i32
    return %c0_i32, %c0_i32_0 : i32, i32
  }
  func.func @transform_5(%arg0: i32, %arg1: i32) -> (i32, i32) {
    %c0_i32 = arith.constant 0 : i32
    %c0_i32_0 = arith.constant 0 : i32
    return %arg0, %c0_i32 : i32, i32
  }
}

</mosaic_0001>

<llo_original>
// kernel: tpu_custom_call.1
$region0: #{tpu_custom_call.1}
  #allocation0 [shape = 'u32[]', space=smem, size = 0x4, offset = 0x4, fixed_abs, tag = 'smem constant byte address 0x4 - core index']
  #allocation1 [shape = 'u32[144,128]{1,0:T(1,128)}', space=vmem, size = 0x12000, scoped, tag = 'internal scratch']
  #allocation2 [shape = 'f32[128,128]{1,0:T(8,128)}', space=vmem, size = 0x10000, scoped, tag = 'scratch operand']
  %s0 = inlined_call_operand.vmem [shape: f32[256,32], index: 0, kind: input, shape index: {}]
  %s1 = inlined_call_operand.vmem [shape: bf16[256,256], index: 1, kind: input, shape index: {}]
  %s2 = inlined_call_operand.hbm [shape: f32[256,128], index: 2, kind: input, shape index: {}]
  %s3 = inlined_call_operand.vmem [shape: f32[32,128], index: 3, kind: input, shape index: {}]
  %s4 = inlined_call_operand.vmem [shape: f32[1,128], index: 4, kind: input, shape index: {}]
  %s5 = inlined_call_operand.hbm [shape: f32[256,128], index: 5, kind: output, shape index: {}]
  %s6 = sld [smem:[#allocation0]]
  $region65: #{tpu_custom_call.1} parent=0
    _
  %s8 = ssub.s32 1, %s6
  %s9 = scalar_select 0, %s8, %s6
  $region1: #{tpu_custom_call.1} parent=0
    #allocation3 [shape = 'u8[131072]{0}', space=vmem, size = 0x20000, scoped, tag = 'input window, operand 2, single buffered']
    #allocation4 [shape = 's32[2]{0}', space=sflag, size = 0x8, scoped, tag = 'scoped memory for tpu_custom_call.1']
    #allocation5 [shape = 's32[2]{0}', space=sflag, size = 0x8, scoped, tag = 'scoped memory for tpu_custom_call.1']
    #allocation6 [shape = 'u8[131072]{0}', space=vmem, size = 0x20000, scoped, tag = 'output window, operand 0']
    %10 = vsyncpa [#allocation4], 0
    %11 = vsyncpa [#allocation5], 0
    %s12 = scalar_lea.sflag [#allocation5], 1
    %13 = vsyncpa %s12, 0
    loop: start=0, step=1, limit=4
    $region2: #{tpu_custom_call.1} parent=1 // loop_pre_header
      _
    $region3: #{tpu_custom_call.1} parent=1 // loop_header
      %s15 = sphi 0, %s19
      %p16 = scmp.ge.s32.totalorder %s15, 4
      %s22 = sphi 0, %s34
      %s23 = sphi 0, %s30
      %s24 = sphi 0, %s22
      %s25 = sphi 0, %s23
      %s26 = sphi 0, %s24
      %s27 = sphi 0, %s25
      %s37 = sphi 0, %s39
      %s40 = sphi 0, %s37
      %s41 = sphi 0, %s40
      %s57 = sphi 0, %s41
      %s65 = sphi 0, %s67
      %s68 = sphi 0, %s65
      %s69 = sphi 0, %s68
      %s85 = sphi 0, %s69
      %s89 = sphi 0, %s89
      %s91 = sphi 0, %s89
      %s92 = sphi 0, %s91
      %s106 = sphi 0, %s92
      %s110 = sphi 0, %s110
      %s112 = sphi 0, %s110
      %s113 = sphi 0, %s112
      %s127 = sphi 0, %s113
      %s131 = sphi 0, %s131
      %s133 = sphi 0, %s131
      %s134 = sphi 0, %s133
      %s148 = sphi 0, %s134
      %s154 = sphi 0, %s156
      %s157 = sphi 0, %s154
      %s158 = sphi 0, %s157
      %s174 = sphi 0, %s158
    $region4: #{tpu_custom_call.1} parent=1 // loop_header_branch
      %18 = sbr.rel (%p16) target = $region8
    $region5: #{tpu_custom_call.1} parent=1 // loop_body
      %s20 = ssub.s32 %s15, 1
      %s21 = ssub.s32 %s15, 2
      %s28 = sadd.s32 1, %s23
      %p29 = scmp.ge.s32.totalorder %s28, 1
      %s30 = scalar_select %p29, 0, %s28
      %s31 = sadd.s32 1, %s22
      %s32 = scalar_select %p29, %s31, %s22
      %p33 = scmp.ge.s32.totalorder %s32, 2
      %s34 = scalar_select %p33, 0, %s32
      %s35 = ssub.s32 %s22, %s34
      %p36 = scmp.eq.s32.totalorder %s35, 0
      %s38 = sadd.s32 %s37, 1
      %s39 = scalar_select %p36, %s37, %s38
      %p42 = pneg %p36
      %p43 = scmp.eq.s32.totalorder %s15, 1
      %p44 = por %p42, %p43
      %p45 = scmp.ne.s32.totalorder %s37, %s40
      %p46 = scmp.eq.s32.totalorder %s15, 0
      %p47 = por %p45, %p46
      %p48 = scmp.ne.s32.totalorder %s37, %s40
      %p49 = scmp.eq.s32.totalorder %s20, 1
      %p50 = por %p48, %p49
      %p51 = scmp.ne.s32.totalorder %s40, %s41
      %p52 = scmp.eq.s32.totalorder %s20, 0
      %p53 = por %p51, %p52
      %p54 = scmp.ne.s32.totalorder %s40, %s41
      %p55 = scmp.eq.s32.totalorder %s21, 1
      %p56 = por %p54, %p55
      %p58 = scmp.ne.s32.totalorder %s41, %s57
      %p59 = scmp.eq.s32.totalorder %s21, 0
      %p60 = por %p58, %p59
      %s61 = ssub.s32 %s22, %s34
      %s62 = ssub.s32 %s23, %s30
      %s63 = sor.u32 %s61, %s62
      %p64 = scmp.eq.s32.totalorder %s63, 0
      %s66 = sadd.s32 %s65, 1
      %s67 = scalar_select %p64, %s65, %s66
      %p70 = pneg %p64
      %p71 = scmp.eq.s32.totalorder %s15, 1
      %p72 = por %p70, %p71
      %p73 = scmp.ne.s32.totalorder %s65, %s68
      %p74 = scmp.eq.s32.totalorder %s15, 0
      %p75 = por %p73, %p74
      %p76 = scmp.ne.s32.totalorder %s65, %s68
      %p77 = scmp.eq.s32.totalorder %s20, 1
      %p78 = por %p76, %p77
      %p79 = scmp.ne.s32.totalorder %s68, %s69
      %p80 = scmp.eq.s32.totalorder %s20, 0
      %p81 = por %p79, %p80
      %p82 = scmp.ne.s32.totalorder %s68, %s69
      %p83 = scmp.eq.s32.totalorder %s21, 1
      %p84 = por %p82, %p83
      %p86 = scmp.ne.s32.totalorder %s69, %s85
      %p87 = scmp.eq.s32.totalorder %s21, 0
      %p88 = por %p86, %p87
      %s90 = sadd.s32 %s89, 1
      %p93 = scmp.eq.s32.totalorder %s15, 1
      %p94 = scmp.ne.s32.totalorder %s89, %s91
      %p95 = scmp.eq.s32.totalorder %s15, 0
      %p96 = por %p94, %p95
      %p97 = scmp.ne.s32.totalorder %s89, %s91
      %p98 = scmp.eq.s32.totalorder %s20, 1
      %p99 = por %p97, %p98
      %p100 = scmp.ne.s32.totalorder %s91, %s92
      %p101 = scmp.eq.s32.totalorder %s20, 0
      %p102 = por %p100, %p101
      %p103 = scmp.ne.s32.totalorder %s91, %s92
      %p104 = scmp.eq.s32.totalorder %s21, 1
      %p105 = por %p103, %p104
      %p107 = scmp.ne.s32.totalorder %s92, %s106
      %p108 = scmp.eq.s32.totalorder %s21, 0
      %p109 = por %p107, %p108
      %s111 = sadd.s32 %s110, 1
      %p114 = scmp.eq.s32.totalorder %s15, 1
      %p115 = scmp.ne.s32.totalorder %s110, %s112
      %p116 = scmp.eq.s32.totalorder %s15, 0
      %p117 = por %p115, %p116
      %p118 = scmp.ne.s32.totalorder %s110, %s112
      %p119 = scmp.eq.s32.totalorder %s20, 1
      %p120 = por %p118, %p119
      %p121 = scmp.ne.s32.totalorder %s112, %s113
      %p122 = scmp.eq.s32.totalorder %s20, 0
      %p123 = por %p121, %p122
      %p124 = scmp.ne.s32.totalorder %s112, %s113
      %p125 = scmp.eq.s32.totalorder %s21, 1
      %p126 = por %p124, %p125
      %p128 = scmp.ne.s32.totalorder %s113, %s127
      %p129 = scmp.eq.s32.totalorder %s21, 0
      %p130 = por %p128, %p129
      %s132 = sadd.s32 %s131, 1
      %p135 = scmp.eq.s32.totalorder %s15, 1
      %p136 = scmp.ne.s32.totalorder %s131, %s133
      %p137 = scmp.eq.s32.totalorder %s15, 0
      %p138 = por %p136, %p137
      %p139 = scmp.ne.s32.totalorder %s131, %s133
      %p140 = scmp.eq.s32.totalorder %s20, 1
      %p141 = por %p139, %p140
      %p142 = scmp.ne.s32.totalorder %s133, %s134
      %p143 = scmp.eq.s32.totalorder %s20, 0
      %p144 = por %p142, %p143
      %p145 = scmp.ne.s32.totalorder %s133, %s134
      %p146 = scmp.eq.s32.totalorder %s21, 1
      %p147 = por %p145, %p146
      %p149 = scmp.ne.s32.totalorder %s134, %s148
      %p150 = scmp.eq.s32.totalorder %s21, 0
      %p151 = por %p149, %p150
      %s152 = ssub.s32 %s22, %s34
      %p153 = scmp.eq.s32.totalorder %s152, 0
      %s155 = sadd.s32 %s154, 1
      %s156 = scalar_select %p153, %s154, %s155
      %p159 = pneg %p153
      %p160 = scmp.eq.s32.totalorder %s15, 1
      %p161 = por %p159, %p160
      %p162 = scmp.ne.s32.totalorder %s154, %s157
      %p163 = scmp.eq.s32.totalorder %s15, 0
      %p164 = por %p162, %p163
      %p165 = scmp.ne.s32.totalorder %s154, %s157
      %p166 = scmp.eq.s32.totalorder %s20, 1
      %p167 = por %p165, %p166
      %p168 = scmp.ne.s32.totalorder %s157, %s158
      %p169 = scmp.eq.s32.totalorder %s20, 0
      %p170 = por %p168, %p169
      %p171 = scmp.ne.s32.totalorder %s157, %s158
      %p172 = scmp.eq.s32.totalorder %s21, 1
      %p173 = por %p171, %p172
      %p175 = scmp.ne.s32.totalorder %s158, %s174
      %p176 = scmp.eq.s32.totalorder %s21, 0
      %p177 = por %p175, %p176
      %p178 = scmp.le.s32.totalorder 1, %s15
      %p179 = scmp.lt.s32.totalorder %s15, 3
      %p180 = pnand %p178, %p179
      %p181 = pneg %p180
      // Predicated region
      $region9: #{tpu_custom_call.1} parent=5 // pred_check
        _
      $region10: #{tpu_custom_call.1} parent=5 // pred_check_branch
        %183 = sbr.rel (%p180) target = $region12
      $region11: #{tpu_custom_call.1} parent=5 // pred_region
        %s184 = ssub.s32 %s15, 1
        // Predicated region
        $region13: #{tpu_custom_call.1} parent=11 // pred_check
          %p185 = pneg %p102
        $region14: #{tpu_custom_call.1} parent=11 // pred_check_branch
          %187 = sbr.rel (%p185) target = $region16
        $region15: #{tpu_custom_call.1} parent=11 // pred_region
          %s189 = ssub.s32 4096, 4096
          %190 = vsyncadd [#allocation4], %s189
          %s191 = sshll.u32 [#allocation3], 4
          %s192 = int_to_ptr.vmem [resolvable:$true] %s191
          %197 = dma.hbm_to_vmem [thread:$0]  %s2, 4096, %s192, [#allocation4], 128, 128, 8
        $region16: #{tpu_custom_call.1} parent=11 // pred_fallthru
          _
        // Predicated region
        $region17: #{tpu_custom_call.1} parent=11 // pred_check
          %p198 = pneg %p123
        $region18: #{tpu_custom_call.1} parent=11 // pred_check_branch
          %200 = sbr.rel (%p198) target = $region20
        $region19: #{tpu_custom_call.1} parent=11 // pred_region
          _
        $region20: #{tpu_custom_call.1} parent=11 // pred_fallthru
          _
        // Predicated region
        $region21: #{tpu_custom_call.1} parent=11 // pred_check
          %p201 = pneg %p144
        $region22: #{tpu_custom_call.1} parent=11 // pred_check_branch
          %203 = sbr.rel (%p201) target = $region24
        $region23: #{tpu_custom_call.1} parent=11 // pred_region
          _
        $region24: #{tpu_custom_call.1} parent=11 // pred_fallthru
          _
      $region12: #{tpu_custom_call.1} parent=5 // pred_fallthru
        _
      %p204 = scmp.lt.s32.totalorder %s15, 2
      // Predicated region
      $region25: #{tpu_custom_call.1} parent=5 // pred_check
        %p205 = pneg %p204
      $region26: #{tpu_custom_call.1} parent=5 // pred_check_branch
        %207 = sbr.rel (%p205) target = $region28
      $region27: #{tpu_custom_call.1} parent=5 // pred_region
        // Predicated region
        $region29: #{tpu_custom_call.1} parent=27 // pred_check
          %p208 = pneg %p47
        $region30: #{tpu_custom_call.1} parent=27 // pred_check_branch
          %210 = sbr.rel (%p208) target = $region32
        $region31: #{tpu_custom_call.1} parent=27 // pred_region
          %s211 = smul.u32 16, %s22
          %p212 = scmp.lt.s32.totalorder %s211, 31
          %s213 = scalar_select %p212, %s211, 31
          %s214 = smul.addr %s213, 8
          %s215 = scalar_lea.vmem %s0, %s214
          %s216 = smul.u32 16, %s22
        $region32: #{tpu_custom_call.1} parent=27 // pred_fallthru
          _
        // Predicated region
        $region33: #{tpu_custom_call.1} parent=27 // pred_check
          %p217 = pneg %p75
        $region34: #{tpu_custom_call.1} parent=27 // pred_check_branch
          %219 = sbr.rel (%p217) target = $region36
        $region35: #{tpu_custom_call.1} parent=27 // pred_region
          %s220 = smul.u32 16, %s22
          %s221 = smul.u32 2, %s23
          %p222 = scmp.lt.s32.totalorder %s220, 31
          %s223 = scalar_select %p222, %s220, 31
          %p224 = scmp.lt.s32.totalorder %s221, 1
          %s225 = scalar_select %p224, %s221, 1
          %s226 = smul.addr %s223, 2
          %s227 = sadd.s32 %s225, %s226
          %s228 = smul.addr %s227, 4
          %s229 = scalar_lea.vmem %s1, %s228
          %s230 = smul.u32 16, %s22
          %s231 = smul.u32 2, %s23
        $region36: #{tpu_custom_call.1} parent=27 // pred_fallthru
          _
      $region28: #{tpu_custom_call.1} parent=5 // pred_fallthru
        _
      %p232 = scmp.le.s32.totalorder 1, %s15
      %p233 = scmp.lt.s32.totalorder %s15, 3
      %p234 = pnand %p232, %p233
      %p235 = pneg %p234
      // Predicated region
      $region37: #{tpu_custom_call.1} parent=5 // pred_check
        _
      $region38: #{tpu_custom_call.1} parent=5 // pred_check_branch
        %237 = sbr.rel (%p234) target = $region40
      $region39: #{tpu_custom_call.1} parent=5 // pred_region
        %s238 = ssub.s32 %s15, 1
        // Predicated region
        $region41: #{tpu_custom_call.1} parent=39 // pred_check
          %p239 = pneg %p102
        $region42: #{tpu_custom_call.1} parent=39 // pred_check_branch
          %241 = sbr.rel (%p239) target = $region44
        $region43: #{tpu_custom_call.1} parent=39 // pred_region
          %242 = dma.done [#allocation4], 4096
        $region44: #{tpu_custom_call.1} parent=39 // pred_fallthru
          _
        %s243 = smul.u32 16, %s24
        %p244 = scmp.lt.s32.totalorder %s243, 31
        %s245 = scalar_select %p244, %s243, 31
        %s246 = smul.addr %s245, 8
        %s247 = scalar_lea.vmem %s0, %s246
        %p248 = pneg %p53
        %p249 = pneg %p50
        %s250 = smul.u32 16, %s24
        %s251 = smul.u32 2, %s25
        %p252 = scmp.lt.s32.totalorder %s250, 31
        %s253 = scalar_select %p252, %s250, 31
        %p254 = scmp.lt.s32.totalorder %s251, 1
        %s255 = scalar_select %p254, %s251, 1
        %s256 = smul.addr %s253, 2
        %s257 = sadd.s32 %s255, %s256
        %s258 = smul.addr %s257, 4
        %s259 = scalar_lea.vmem %s1, %s258
        %p260 = pneg %p81
        %p261 = pneg %p78
        %p262 = pneg %p102
        %p263 = pneg %p99
        %p264 = pneg %p123
        %p265 = pneg %p120
        %p266 = pneg %p144
        %p267 = pneg %p141
        %p268 = pneg %p170
        %p269 = pneg %p167
        %s270 = sand.u32 %s157, 1
        %s271 = scalar_lea.sflag [#allocation5], %s270
        %s272 = sand.u32 %s157, 1
        %s273 = smul.addr %s272, 128
        %s274 = scalar_lea.vmem [#allocation6], %s273
        %s275 = smul.u32 16, %s24
        %p276 = scmp.lt.s32.totalorder %s275, 31
        %s277 = scalar_select %p276, %s275, 31
        %s278 = smul.addr %s277, 8
        %s279 = scalar_lea.vmem %s0, %s278
        %s280 = smul.u32 16, %s24
        %s281 = smul.u32 16, %s24
        %s282 = smul.u32 2, %s25
        %p283 = scmp.lt.s32.totalorder %s281, 31
        %s284 = scalar_select %p283, %s281, 31
        %p285 = scmp.lt.s32.totalorder %s282, 1
        %s286 = scalar_select %p285, %s282, 1
        %s287 = smul.addr %s284, 2
        %s288 = sadd.s32 %s286, %s287
        %s289 = smul.addr %s288, 4
        %s290 = scalar_lea.vmem %s1, %s289
        %s291 = smul.u32 16, %s24
        %s292 = smul.u32 2, %s25
        %s293 = smul.u32 16, %s24
        %p294 = scmp.eq.s32.totalorder %s25, 0
        // Predicated region
        $region45: #{tpu_custom_call.1} parent=39 // pred_check
          %p295 = pneg %p294
        $region46: #{tpu_custom_call.1} parent=39 // pred_check_branch
          %297 = sbr.rel (%p295) target = $region48
        $region47: #{tpu_custom_call.1} parent=39 // pred_region
          %v298 = vld [vmem:[%s279] sm:$0xff]
          %v299 = vld [vmem:[%s279 + $0x8] sm:$0xff]
          %v300 = vld [vmem:[%s279 + $0x10] sm:$0xff]
          %v301 = vld [vmem:[%s279 + $0x18] sm:$0xff]
          %v302 = vld [vmem:[%s279 + $0x20] sm:$0xff]
          %v303 = vld [vmem:[%s279 + $0x28] sm:$0xff]
          %v304 = vld [vmem:[%s279 + $0x30] sm:$0xff]
          %v305 = vld [vmem:[%s279 + $0x38] sm:$0xff]
          %v306 = vld [vmem:[%s279 + $0x40] sm:$0xff]
          %v307 = vld [vmem:[%s279 + $0x48] sm:$0xff]
          %v308 = vld [vmem:[%s279 + $0x50] sm:$0xff]
          %v309 = vld [vmem:[%s279 + $0x58] sm:$0xff]
          %v310 = vld [vmem:[%s279 + $0x60] sm:$0xff]
          %v311 = vld [vmem:[%s279 + $0x68] sm:$0xff]
          %v312 = vld [vmem:[%s279 + $0x70] sm:$0xff]
          %v313 = vld [vmem:[%s279 + $0x78] sm:$0xff]
          %v314 = vld [vmem:[%s3] sm:$0xff]
          %v315 = vld [vmem:[%s3 + $0x8] sm:$0xff]
          %v316 = vld [vmem:[%s3 + $0x10] sm:$0xff]
          %v317 = vld [vmem:[%s3 + $0x18] sm:$0xff]
          %v318 = vld [vmem:[%s4] sm:$0x1]
          %v320 = vlaneseq
          %v321 = vshrl.u32 %v320, 7
          %v322 = vsub.s32 0, %v321
          %v323 = vrot.slane %v318, %v322
          %vm325 = vcmask 261120
          %v327 = vsel %vm325, %v298, 0
          %v330 = vsel %vm325, %v299, 0
          %v333 = vsel %vm325, %v300, 0
          %v336 = vsel %vm325, %v301, 0
          %v339 = vsel %vm325, %v302, 0
          %v342 = vsel %vm325, %v303, 0
          %v345 = vsel %vm325, %v304, 0
          %v348 = vsel %vm325, %v305, 0
          %v351 = vsel %vm325, %v306, 0
          %v354 = vsel %vm325, %v307, 0
          %v357 = vsel %vm325, %v308, 0
          %v360 = vsel %vm325, %v309, 0
          %v363 = vsel %vm325, %v310, 0
          %v366 = vsel %vm325, %v311, 0
          %v369 = vsel %vm325, %v312, 0
          %v372 = vsel %vm325, %v313, 0
          %374 = vmatprep.subr.mxu0 0.0
          %375 = vmatpush1.msra.mxu0 0.0
          %376 = vmatprep.subr.mxu0 0.0
          %377 = vmatpush1.msra.mxu0 0.0
          %378 = vmatprep.subr.mxu0 0.0
          %379 = vmatpush1.msra.mxu0 0.0
          %380 = vmatprep.subr.mxu0 0.0
          %381 = vmatpush1.msra.mxu0 0.0
          %382 = vmatprep.subr.mxu0 0.0
          %383 = vmatpush1.msra.mxu0 0.0
          %384 = vmatprep.subr.mxu0 0.0
          %385 = vmatpush1.msra.mxu0 0.0
          %386 = vmatprep.subr.mxu0 0.0
          %387 = vmatpush1.msra.mxu0 0.0
          %388 = vmatprep.subr.mxu0 0.0
          %389 = vmatpush1.msra.mxu0 0.0
          %390 = vmatprep.subr.mxu0 0.0
          %391 = vmatpush1.msra.mxu0 0.0
          %392 = vmatprep.subr.mxu0 0.0
          %393 = vmatpush1.msra.mxu0 0.0
          %394 = vmatprep.subr.mxu0 0.0
          %395 = vmatpush1.msra.mxu0 0.0
          %396 = vmatprep.subr.mxu0 0.0
          %397 = vmatpush1.msra.mxu0 0.0
          %398 = vmatprep.subr.mxu0 0.0
          %399 = vmatpush1.msra.mxu0 %v317
          %400 = vmatprep.subr.mxu0 0.0
          %401 = vmatpush1.msra.mxu0 %v316
          %402 = vmatprep.subr.mxu0 0.0
          %403 = vmatpush1.msra.mxu0 %v315
          %404 = vmatprep.subr.mxu0 0.0
          %405 = vmatpush1.msra.mxu0 %v314
          %406 = vmatprep.subr.mxu0 0.0
          %407 = vmatpush2.msra.mxu0 0.0
          %408 = vmatprep.subr.mxu0 0.0
          %409 = vmatpush2.msra.mxu0 0.0
          %410 = vmatprep.subr.mxu0 0.0
          %411 = vmatpush2.msra.mxu0 0.0
          %412 = vmatprep.subr.mxu0 0.0
          %413 = vmatpush2.msra.mxu0 0.0
          %414 = vmatprep.subr.mxu0 0.0
          %415 = vmatpush2.msra.mxu0 0.0
          %416 = vmatprep.subr.mxu0 0.0
          %417 = vmatpush2.msra.mxu0 0.0
          %418 = vmatprep.subr.mxu0 0.0
          %419 = vmatpush2.msra.mxu0 0.0
          %420 = vmatprep.subr.mxu0 0.0
          %421 = vmatpush2.msra.mxu0 0.0
          %422 = vmatprep.subr.mxu0 0.0
          %423 = vmatpush2.msra.mxu0 0.0
          %424 = vmatprep.subr.mxu0 0.0
          %425 = vmatpush2.msra.mxu0 0.0
          %426 = vmatprep.subr.mxu0 0.0
          %427 = vmatpush2.msra.mxu0 0.0
          %428 = vmatprep.subr.mxu0 0.0
          %429 = vmatpush2.msra.mxu0 0.0
          %430 = vmatprep.subr.mxu0 0.0
          %431 = vmatpush2.msra.mxu0 0.0
          %432 = vmatprep.subr.mxu0 0.0
          %433 = vmatpush2.msra.mxu0 0.0
          %434 = vmatprep.subr.mxu0 0.0
          %435 = vmatpush2.msra.mxu0 0.0
          %436 = vmatprep.subr.mxu0 0.0
          %437 = vmatpush2.msra.mxu0 0.0
          %438 = vmatprep.mubr.f32.mxu0 0.0
          %439 = vmatmul.mubr.f32.gmra.mxu0 %v327
          %v440 = vpop.f32.mrf.mxu0
          %v441 = vadd.f32 %v323, %v440
          %v442 = vpop.f32.mrf.mxu0
          %443 = vmatprep.mubr.f32.mxu0 0.0
          %444 = vmatmul.mubr.f32.gmra.mxu0 %v330
          %v445 = vpop.f32.mrf.mxu0
          %v446 = vadd.f32 %v323, %v445
          %v447 = vpop.f32.mrf.mxu0
          %448 = vmatprep.mubr.f32.mxu0 0.0
          %449 = vmatmul.mubr.f32.gmra.mxu0 %v333
          %v450 = vpop.f32.mrf.mxu0
          %v451 = vadd.f32 %v323, %v450
          %v452 = vpop.f32.mrf.mxu0
          %453 = vmatprep.mubr.f32.mxu0 0.0
          %454 = vmatmul.mubr.f32.gmra.mxu0 %v336
          %v455 = vpop.f32.mrf.mxu0
          %v456 = vadd.f32 %v323, %v455
          %v457 = vpop.f32.mrf.mxu0
          %458 = vmatprep.mubr.f32.mxu0 0.0
          %459 = vmatmul.mubr.f32.gmra.mxu0 %v339
          %v460 = vpop.f32.mrf.mxu0
          %v461 = vadd.f32 %v323, %v460
          %v462 = vpop.f32.mrf.mxu0
          %463 = vmatprep.mubr.f32.mxu0 0.0
          %464 = vmatmul.mubr.f32.gmra.mxu0 %v342
          %v465 = vpop.f32.mrf.mxu0
          %v466 = vadd.f32 %v323, %v465
          %v467 = vpop.f32.mrf.mxu0
          %468 = vmatprep.mubr.f32.mxu0 0.0
          %469 = vmatmul.mubr.f32.gmra.mxu0 %v345
          %v470 = vpop.f32.mrf.mxu0
          %v471 = vadd.f32 %v323, %v470
          %v472 = vpop.f32.mrf.mxu0
          %473 = vmatprep.mubr.f32.mxu0 0.0
          %474 = vmatmul.mubr.f32.gmra.mxu0 %v348
          %v475 = vpop.f32.mrf.mxu0
          %v476 = vadd.f32 %v323, %v475
          %v477 = vpop.f32.mrf.mxu0
          %478 = vmatprep.mubr.f32.mxu0 0.0
          %479 = vmatmul.mubr.f32.gmra.mxu0 %v351
          %v480 = vpop.f32.mrf.mxu0
          %v481 = vadd.f32 %v323, %v480
          %v482 = vpop.f32.mrf.mxu0
          %483 = vmatprep.mubr.f32.mxu0 0.0
          %484 = vmatmul.mubr.f32.gmra.mxu0 %v354
          %v485 = vpop.f32.mrf.mxu0
          %v486 = vadd.f32 %v323, %v485
          %v487 = vpop.f32.mrf.mxu0
          %488 = vmatprep.mubr.f32.mxu0 0.0
          %489 = vmatmul.mubr.f32.gmra.mxu0 %v357
          %v490 = vpop.f32.mrf.mxu0
          %v491 = vadd.f32 %v323, %v490
          %v492 = vpop.f32.mrf.mxu0
          %493 = vmatprep.mubr.f32.mxu0 0.0
          %494 = vmatmul.mubr.f32.gmra.mxu0 %v360
          %v495 = vpop.f32.mrf.mxu0
          %v496 = vadd.f32 %v323, %v495
          %v497 = vpop.f32.mrf.mxu0
          %498 = vmatprep.mubr.f32.mxu0 0.0
          %499 = vmatmul.mubr.f32.gmra.mxu0 %v363
          %v500 = vpop.f32.mrf.mxu0
          %v501 = vadd.f32 %v323, %v500
          %v502 = vpop.f32.mrf.mxu0
          %503 = vmatprep.mubr.f32.mxu0 0.0
          %504 = vmatmul.mubr.f32.gmra.mxu0 %v366
          %v505 = vpop.f32.mrf.mxu0
          %v506 = vadd.f32 %v323, %v505
          %v507 = vpop.f32.mrf.mxu0
          %508 = vmatprep.mubr.f32.mxu0 0.0
          %509 = vmatmul.mubr.f32.gmra.mxu0 %v369
          %v510 = vpop.f32.mrf.mxu0
          %v511 = vadd.f32 %v323, %v510
          %v512 = vpop.f32.mrf.mxu0
          %513 = vmatprep.mubr.f32.mxu0 0.0
          %514 = vmatmul.mubr.f32.gmra.mxu0 %v372
          %v515 = vpop.f32.mrf.mxu0
          %v516 = vadd.f32 %v323, %v515
          %v517 = vpop.f32.mrf.mxu0
          %518 = vdwg.mxu0
          %519 = vst [vmem:[#allocation2] sm:$0xff] %v441
          %520 = vst [vmem:[#allocation2 + $0x8] sm:$0xff] %v446
          %521 = vst [vmem:[#allocation2 + $0x10] sm:$0xff] %v451
          %522 = vst [vmem:[#allocation2 + $0x18] sm:$0xff] %v456
          %523 = vst [vmem:[#allocation2 + $0x20] sm:$0xff] %v461
          %524 = vst [vmem:[#allocation2 + $0x28] sm:$0xff] %v466
          %525 = vst [vmem:[#allocation2 + $0x30] sm:$0xff] %v471
          %526 = vst [vmem:[#allocation2 + $0x38] sm:$0xff] %v476
          %527 = vst [vmem:[#allocation2 + $0x40] sm:$0xff] %v481
          %528 = vst [vmem:[#allocation2 + $0x48] sm:$0xff] %v486
          %529 = vst [vmem:[#allocation2 + $0x50] sm:$0xff] %v491
          %530 = vst [vmem:[#allocation2 + $0x58] sm:$0xff] %v496
          %531 = vst [vmem:[#allocation2 + $0x60] sm:$0xff] %v501
          %532 = vst [vmem:[#allocation2 + $0x68] sm:$0xff] %v506
          %533 = vst [vmem:[#allocation2 + $0x70] sm:$0xff] %v511
          %534 = vst [vmem:[#allocation2 + $0x78] sm:$0xff] %v516
        $region48: #{tpu_custom_call.1} parent=39 // pred_fallthru
          _
        %s535 = smul.u32 %s25, 256
        %s536 = scalar_lea.vmem [#allocation3], %s535
        %v537 = vld [vmem:[%s536] sm:$0xff]
        %v538 = vld [vmem:[%s536 + $0x8] sm:$0xff]
        %v539 = vld [vmem:[%s536 + $0x10] sm:$0xff]
        %v540 = vld [vmem:[%s536 + $0x18] sm:$0xff]
        %v541 = vld [vmem:[%s536 + $0x20] sm:$0xff]
        %v542 = vld [vmem:[%s536 + $0x28] sm:$0xff]
        %v543 = vld [vmem:[%s536 + $0x30] sm:$0xff]
        %v544 = vld [vmem:[%s536 + $0x38] sm:$0xff]
        %v545 = vld [vmem:[%s536 + $0x40] sm:$0xff]
        %v546 = vld [vmem:[%s536 + $0x48] sm:$0xff]
        %v547 = vld [vmem:[%s536 + $0x50] sm:$0xff]
        %v548 = vld [vmem:[%s536 + $0x58] sm:$0xff]
        %v549 = vld [vmem:[%s536 + $0x60] sm:$0xff]
        %v550 = vld [vmem:[%s536 + $0x68] sm:$0xff]
        %v551 = vld [vmem:[%s536 + $0x70] sm:$0xff]
        %v552 = vld [vmem:[%s536 + $0x78] sm:$0xff]
        %v553 = vld [vmem:[%s536 + $0x80] sm:$0xff]
        %v554 = vld [vmem:[%s536 + $0x88] sm:$0xff]
        %v555 = vld [vmem:[%s536 + $0x90] sm:$0xff]
        %v556 = vld [vmem:[%s536 + $0x98] sm:$0xff]
        %v557 = vld [vmem:[%s536 + $0xa0] sm:$0xff]
        %v558 = vld [vmem:[%s536 + $0xa8] sm:$0xff]
        %v559 = vld [vmem:[%s536 + $0xb0] sm:$0xff]
        %v560 = vld [vmem:[%s536 + $0xb8] sm:$0xff]
        %v561 = vld [vmem:[%s536 + $0xc0] sm:$0xff]
        %v562 = vld [vmem:[%s536 + $0xc8] sm:$0xff]
        %v563 = vld [vmem:[%s536 + $0xd0] sm:$0xff]
        %v564 = vld [vmem:[%s536 + $0xd8] sm:$0xff]
        %v565 = vld [vmem:[%s536 + $0xe0] sm:$0xff]
        %v566 = vld [vmem:[%s536 + $0xe8] sm:$0xff]
        %v567 = vld [vmem:[%s536 + $0xf0] sm:$0xff]
        %v568 = vld [vmem:[%s536 + $0xf8] sm:$0xff]
        %v569 = vld [vmem:[%s290] sm:$0xff]
        %v570 = vld [vmem:[%s290 + $0x8] sm:$0xff]
        %v571 = vld [vmem:[%s290 + $0x10] sm:$0xff]
        %v572 = vld [vmem:[%s290 + $0x18] sm:$0xff]
        %v573 = vld [vmem:[%s290 + $0x20] sm:$0xff]
        %v574 = vld [vmem:[%s290 + $0x28] sm:$0xff]
        %v575 = vld [vmem:[%s290 + $0x30] sm:$0xff]
        %v576 = vld [vmem:[%s290 + $0x38] sm:$0xff]
        %v577 = vld [vmem:[%s290 + $0x40] sm:$0xff]
        %v578 = vld [vmem:[%s290 + $0x48] sm:$0xff]
        %v579 = vld [vmem:[%s290 + $0x50] sm:$0xff]
        %v580 = vld [vmem:[%s290 + $0x58] sm:$0xff]
        %v581 = vld [vmem:[%s290 + $0x60] sm:$0xff]
        %v582 = vld [vmem:[%s290 + $0x68] sm:$0xff]
        %v583 = vld [vmem:[%s290 + $0x70] sm:$0xff]
        %v584 = vld [vmem:[%s290 + $0x78] sm:$0xff]
        %v585 = vunpack.c.l.bf16 %v569
        %v586 = vunpack.c.h.bf16 %v569
        %v587 = vunpack.c.l.bf16 %v570
        %v588 = vunpack.c.h.bf16 %v570
        %v589 = vunpack.c.l.bf16 %v571
        %v590 = vunpack.c.h.bf16 %v571
        %v591 = vunpack.c.l.bf16 %v572
        %v592 = vunpack.c.h.bf16 %v572
        %v593 = vunpack.c.l.bf16 %v573
        %v594 = vunpack.c.h.bf16 %v573
        %v595 = vunpack.c.l.bf16 %v574
        %v596 = vunpack.c.h.bf16 %v574
        %v597 = vunpack.c.l.bf16 %v575
        %v598 = vunpack.c.h.bf16 %v575
        %v599 = vunpack.c.l.bf16 %v576
        %v600 = vunpack.c.h.bf16 %v576
        %v601 = vunpack.c.l.bf16 %v577
        %v602 = vunpack.c.h.bf16 %v577
        %v603 = vunpack.c.l.bf16 %v578
        %v604 = vunpack.c.h.bf16 %v578
        %v605 = vunpack.c.l.bf16 %v579
        %v606 = vunpack.c.h.bf16 %v579
        %v607 = vunpack.c.l.bf16 %v580
        %v608 = vunpack.c.h.bf16 %v580
        %v609 = vunpack.c.l.bf16 %v581
        %v610 = vunpack.c.h.bf16 %v581
        %v611 = vunpack.c.l.bf16 %v582
        %v612 = vunpack.c.h.bf16 %v582
        %v613 = vunpack.c.l.bf16 %v583
        %v614 = vunpack.c.h.bf16 %v583
        %v615 = vunpack.c.l.bf16 %v584
        %v616 = vunpack.c.h.bf16 %v584
        %v617 = vld [vmem:[#allocation2] sm:$0xff]
        %v618 = vld [vmem:[#allocation2 + $0x8] sm:$0xff]
        %v619 = vld [vmem:[#allocation2 + $0x10] sm:$0xff]
        %v620 = vld [vmem:[#allocation2 + $0x18] sm:$0xff]
        %v621 = vld [vmem:[#allocation2 + $0x20] sm:$0xff]
        %v622 = vld [vmem:[#allocation2 + $0x28] sm:$0xff]
        %v623 = vld [vmem:[#allocation2 + $0x30] sm:$0xff]
        %v624 = vld [vmem:[#allocation2 + $0x38] sm:$0xff]
        %v625 = vld [vmem:[#allocation2 + $0x40] sm:$0xff]
        %v626 = vld [vmem:[#allocation2 + $0x48] sm:$0xff]
        %v627 = vld [vmem:[#allocation2 + $0x50] sm:$0xff]
        %v628 = vld [vmem:[#allocation2 + $0x58] sm:$0xff]
        %v629 = vld [vmem:[#allocation2 + $0x60] sm:$0xff]
        %v630 = vld [vmem:[#allocation2 + $0x68] sm:$0xff]
        %v631 = vld [vmem:[#allocation2 + $0x70] sm:$0xff]
        %v632 = vld [vmem:[#allocation2 + $0x78] sm:$0xff]
        %633 = vmatprep.subr.mxu0 0.0
        %634 = vmatpush1.msra.mxu0 %v552
        %635 = vmatprep.subr.mxu0 0.0
        %636 = vmatpush1.msra.mxu0 %v551
        %637 = vmatprep.subr.mxu0 0.0
        %638 = vmatpush1.msra.mxu0 %v550
        %639 = vmatprep.subr.mxu0 0.0
        %640 = vmatpush1.msra.mxu0 %v549
        %641 = vmatprep.subr.mxu0 0.0
        %642 = vmatpush1.msra.mxu0 %v548
        %643 = vmatprep.subr.mxu0 0.0
        %644 = vmatpush1.msra.mxu0 %v547
        %645 = vmatprep.subr.mxu0 0.0
        %646 = vmatpush1.msra.mxu0 %v546
        %647 = vmatprep.subr.mxu0 0.0
        %648 = vmatpush1.msra.mxu0 %v545
        %649 = vmatprep.subr.mxu0 0.0
        %650 = vmatpush1.msra.mxu0 %v544
        %651 = vmatprep.subr.mxu0 0.0
        %652 = vmatpush1.msra.mxu0 %v543
        %653 = vmatprep.subr.mxu0 0.0
        %654 = vmatpush1.msra.mxu0 %v542
        %655 = vmatprep.subr.mxu0 0.0
        %656 = vmatpush1.msra.mxu0 %v541
        %657 = vmatprep.subr.mxu0 0.0
        %658 = vmatpush1.msra.mxu0 %v540
        %659 = vmatprep.subr.mxu0 0.0
        %660 = vmatpush1.msra.mxu0 %v539
        %661 = vmatprep.subr.mxu0 0.0
        %662 = vmatpush1.msra.mxu0 %v538
        %663 = vmatprep.subr.mxu0 0.0
        %664 = vmatpush1.msra.mxu0 %v537
        %665 = vmatprep.subr.mxu0 0.0
        %666 = vmatpush2.msra.mxu0 %v568
        %667 = vmatprep.subr.mxu0 0.0
        %668 = vmatpush2.msra.mxu0 %v567
        %669 = vmatprep.subr.mxu0 0.0
        %670 = vmatpush2.msra.mxu0 %v566
        %671 = vmatprep.subr.mxu0 0.0
        %672 = vmatpush2.msra.mxu0 %v565
        %673 = vmatprep.subr.mxu0 0.0
        %674 = vmatpush2.msra.mxu0 %v564
        %675 = vmatprep.subr.mxu0 0.0
        %676 = vmatpush2.msra.mxu0 %v563
        %677 = vmatprep.subr.mxu0 0.0
        %678 = vmatpush2.msra.mxu0 %v562
        %679 = vmatprep.subr.mxu0 0.0
        %680 = vmatpush2.msra.mxu0 %v561
        %681 = vmatprep.subr.mxu0 0.0
        %682 = vmatpush2.msra.mxu0 %v560
        %683 = vmatprep.subr.mxu0 0.0
        %684 = vmatpush2.msra.mxu0 %v559
        %685 = vmatprep.subr.mxu0 0.0
        %686 = vmatpush2.msra.mxu0 %v558
        %687 = vmatprep.subr.mxu0 0.0
        %688 = vmatpush2.msra.mxu0 %v557
        %689 = vmatprep.subr.mxu0 0.0
        %690 = vmatpush2.msra.mxu0 %v556
        %691 = vmatprep.subr.mxu0 0.0
        %692 = vmatpush2.msra.mxu0 %v555
        %693 = vmatprep.subr.mxu0 0.0
        %694 = vmatpush2.msra.mxu0 %v554
        %695 = vmatprep.subr.mxu0 0.0
        %696 = vmatpush2.msra.mxu0 %v553
        %697 = vmatprep.mubr.f32.mxu0 %v586
        %698 = vmatmul.mubr.f32.gmra.mxu0 %v585
        %v699 = vpop.f32.mrf.mxu0
        %v700 = vadd.f32 0.0, %v699
        %v701 = vpop.f32.mrf.mxu0
        %702 = vmatprep.mubr.f32.mxu0 %v588
        %703 = vmatmul.mubr.f32.gmra.mxu0 %v587
        %v704 = vpop.f32.mrf.mxu0
        %v705 = vadd.f32 0.0, %v704
        %v706 = vpop.f32.mrf.mxu0
        %707 = vmatprep.mubr.f32.mxu0 %v590
        %708 = vmatmul.mubr.f32.gmra.mxu0 %v589
        %v709 = vpop.f32.mrf.mxu0
        %v710 = vadd.f32 0.0, %v709
        %v711 = vpop.f32.mrf.mxu0
        %712 = vmatprep.mubr.f32.mxu0 %v592
        %713 = vmatmul.mubr.f32.gmra.mxu0 %v591
        %v714 = vpop.f32.mrf.mxu0
        %v715 = vadd.f32 0.0, %v714
        %v716 = vpop.f32.mrf.mxu0
        %717 = vmatprep.mubr.f32.mxu0 %v594
        %718 = vmatmul.mubr.f32.gmra.mxu0 %v593
        %v719 = vpop.f32.mrf.mxu0
        %v720 = vadd.f32 0.0, %v719
        %v721 = vpop.f32.mrf.mxu0
        %722 = vmatprep.mubr.f32.mxu0 %v596
        %723 = vmatmul.mubr.f32.gmra.mxu0 %v595
        %v724 = vpop.f32.mrf.mxu0
        %v725 = vadd.f32 0.0, %v724
        %v726 = vpop.f32.mrf.mxu0
        %727 = vmatprep.mubr.f32.mxu0 %v598
        %728 = vmatmul.mubr.f32.gmra.mxu0 %v597
        %v729 = vpop.f32.mrf.mxu0
        %v730 = vadd.f32 0.0, %v729
        %v731 = vpop.f32.mrf.mxu0
        %732 = vmatprep.mubr.f32.mxu0 %v600
        %733 = vmatmul.mubr.f32.gmra.mxu0 %v599
        %v734 = vpop.f32.mrf.mxu0
        %v735 = vadd.f32 0.0, %v734
        %v736 = vpop.f32.mrf.mxu0
        %737 = vmatprep.mubr.f32.mxu0 %v602
        %738 = vmatmul.mubr.f32.gmra.mxu0 %v601
        %v739 = vpop.f32.mrf.mxu0
        %v740 = vadd.f32 0.0, %v739
        %v741 = vpop.f32.mrf.mxu0
        %742 = vmatprep.mubr.f32.mxu0 %v604
        %743 = vmatmul.mubr.f32.gmra.mxu0 %v603
        %v744 = vpop.f32.mrf.mxu0
        %v745 = vadd.f32 0.0, %v744
        %v746 = vpop.f32.mrf.mxu0
        %747 = vmatprep.mubr.f32.mxu0 %v606
        %748 = vmatmul.mubr.f32.gmra.mxu0 %v605
        %v749 = vpop.f32.mrf.mxu0
        %v750 = vadd.f32 0.0, %v749
        %v751 = vpop.f32.mrf.mxu0
        %752 = vmatprep.mubr.f32.mxu0 %v608
        %753 = vmatmul.mubr.f32.gmra.mxu0 %v607
        %v754 = vpop.f32.mrf.mxu0
        %v755 = vadd.f32 0.0, %v754
        %v756 = vpop.f32.mrf.mxu0
        %757 = vmatprep.mubr.f32.mxu0 %v610
        %758 = vmatmul.mubr.f32.gmra.mxu0 %v609
        %v759 = vpop.f32.mrf.mxu0
        %v760 = vadd.f32 0.0, %v759
        %v761 = vpop.f32.mrf.mxu0
        %762 = vmatprep.mubr.f32.mxu0 %v612
        %763 = vmatmul.mubr.f32.gmra.mxu0 %v611
        %v764 = vpop.f32.mrf.mxu0
        %v765 = vadd.f32 0.0, %v764
        %v766 = vpop.f32.mrf.mxu0
        %767 = vmatprep.mubr.f32.mxu0 %v614
        %768 = vmatmul.mubr.f32.gmra.mxu0 %v613
        %v769 = vpop.f32.mrf.mxu0
        %v770 = vadd.f32 0.0, %v769
        %v771 = vpop.f32.mrf.mxu0
        %772 = vmatprep.mubr.f32.mxu0 %v616
        %773 = vmatmul.mubr.f32.gmra.mxu0 %v615
        %v774 = vpop.f32.mrf.mxu0
        %v775 = vadd.f32 0.0, %v774
        %v776 = vpop.f32.mrf.mxu0
        %777 = vdwg.mxu0
        %v778 = vadd.f32 %v617, %v700
        %v779 = vadd.f32 %v618, %v705
        %v780 = vadd.f32 %v619, %v710
        %v781 = vadd.f32 %v620, %v715
        %v782 = vadd.f32 %v621, %v720
        %v783 = vadd.f32 %v622, %v725
        %v784 = vadd.f32 %v623, %v730
        %v785 = vadd.f32 %v624, %v735
        %v786 = vadd.f32 %v625, %v740
        %v787 = vadd.f32 %v626, %v745
        %v788 = vadd.f32 %v627, %v750
        %v789 = vadd.f32 %v628, %v755
        %v790 = vadd.f32 %v629, %v760
        %v791 = vadd.f32 %v630, %v765
        %v792 = vadd.f32 %v631, %v770
        %v793 = vadd.f32 %v632, %v775
        %794 = vst [vmem:[#allocation2] sm:$0xff] %v778
        %795 = vst [vmem:[#allocation2 + $0x8] sm:$0xff] %v779
        %796 = vst [vmem:[#allocation2 + $0x10] sm:$0xff] %v780
        %797 = vst [vmem:[#allocation2 + $0x18] sm:$0xff] %v781
        %798 = vst [vmem:[#allocation2 + $0x20] sm:$0xff] %v782
        %799 = vst [vmem:[#allocation2 + $0x28] sm:$0xff] %v783
        %800 = vst [vmem:[#allocation2 + $0x30] sm:$0xff] %v784
        %801 = vst [vmem:[#allocation2 + $0x38] sm:$0xff] %v785
        %802 = vst [vmem:[#allocation2 + $0x40] sm:$0xff] %v786
        %803 = vst [vmem:[#allocation2 + $0x48] sm:$0xff] %v787
        %804 = vst [vmem:[#allocation2 + $0x50] sm:$0xff] %v788
        %805 = vst [vmem:[#allocation2 + $0x58] sm:$0xff] %v789
        %806 = vst [vmem:[#allocation2 + $0x60] sm:$0xff] %v790
        %807 = vst [vmem:[#allocation2 + $0x68] sm:$0xff] %v791
        %808 = vst [vmem:[#allocation2 + $0x70] sm:$0xff] %v792
        %809 = vst [vmem:[#allocation2 + $0x78] sm:$0xff] %v793
        // Predicated region
        $region49: #{tpu_custom_call.1} parent=39 // pred_check
          %p810 = pneg %p294
        $region50: #{tpu_custom_call.1} parent=39 // pred_check_branch
          %812 = sbr.rel (%p810) target = $region52
        $region51: #{tpu_custom_call.1} parent=39 // pred_region
          %v813 = vld [vmem:[#allocation2] sm:$0xff]
          %v814 = vld [vmem:[#allocation2 + $0x8] sm:$0xff]
          %v815 = vld [vmem:[#allocation2 + $0x10] sm:$0xff]
          %v816 = vld [vmem:[#allocation2 + $0x18] sm:$0xff]
          %v817 = vld [vmem:[#allocation2 + $0x20] sm:$0xff]
          %v818 = vld [vmem:[#allocation2 + $0x28] sm:$0xff]
          %v819 = vld [vmem:[#allocation2 + $0x30] sm:$0xff]
          %v820 = vld [vmem:[#allocation2 + $0x38] sm:$0xff]
          %v821 = vld [vmem:[#allocation2 + $0x40] sm:$0xff]
          %v822 = vld [vmem:[#allocation2 + $0x48] sm:$0xff]
          %v823 = vld [vmem:[#allocation2 + $0x50] sm:$0xff]
          %v824 = vld [vmem:[#allocation2 + $0x58] sm:$0xff]
          %v825 = vld [vmem:[#allocation2 + $0x60] sm:$0xff]
          %v826 = vld [vmem:[#allocation2 + $0x68] sm:$0xff]
          %v827 = vld [vmem:[#allocation2 + $0x70] sm:$0xff]
          %v828 = vld [vmem:[#allocation2 + $0x78] sm:$0xff]
          %829 = vst [vmem:[%s274] sm:$0xff] %v813
          %830 = vst [vmem:[%s274 + $0x8] sm:$0xff] %v814
          %831 = vst [vmem:[%s274 + $0x10] sm:$0xff] %v815
          %832 = vst [vmem:[%s274 + $0x18] sm:$0xff] %v816
          %833 = vst [vmem:[%s274 + $0x20] sm:$0xff] %v817
          %834 = vst [vmem:[%s274 + $0x28] sm:$0xff] %v818
          %835 = vst [vmem:[%s274 + $0x30] sm:$0xff] %v819
          %836 = vst [vmem:[%s274 + $0x38] sm:$0xff] %v820
          %837 = vst [vmem:[%s274 + $0x40] sm:$0xff] %v821
          %838 = vst [vmem:[%s274 + $0x48] sm:$0xff] %v822
          %839 = vst [vmem:[%s274 + $0x50] sm:$0xff] %v823
          %840 = vst [vmem:[%s274 + $0x58] sm:$0xff] %v824
          %841 = vst [vmem:[%s274 + $0x60] sm:$0xff] %v825
          %842 = vst [vmem:[%s274 + $0x68] sm:$0xff] %v826
          %843 = vst [vmem:[%s274 + $0x70] sm:$0xff] %v827
          %844 = vst [vmem:[%s274 + $0x78] sm:$0xff] %v828
        $region52: #{tpu_custom_call.1} parent=39 // pred_fallthru
          _
        %s845 = sand.u32 %s157, 1
        %s846 = scalar_lea.sflag [#allocation5], %s845
        %s847 = sand.u32 %s157, 1
        %s848 = smul.addr %s847, 128
        %s849 = scalar_lea.vmem [#allocation6], %s848
        // Predicated region
        $region53: #{tpu_custom_call.1} parent=39 // pred_check
          %p850 = pneg %p167
        $region54: #{tpu_custom_call.1} parent=39 // pred_check_branch
          %852 = sbr.rel (%p850) target = $region56
        $region55: #{tpu_custom_call.1} parent=39 // pred_region
          %s853 = smul.u32 16, %s24
          %s855 = ssub.s32 2048, 2048
          %856 = vsyncadd %s846, %s855
          %s857 = smul.addr %s853, 128
          %s858 = scalar_lea.hbm %s5, %s857
          %s859 = sshll.u32 %s849, 4
          %s860 = int_to_ptr.vmem [resolvable:$true] %s859
          %865 = dma.vmem_to_hbm [thread:$0]  %s860, 2048, %s858, %s846, 128, 128, 8
        $region56: #{tpu_custom_call.1} parent=39 // pred_fallthru
          _
      $region40: #{tpu_custom_call.1} parent=5 // pred_fallthru
        _
      %p866 = scmp.le.s32.totalorder 2, %s15
      // Predicated region
      $region57: #{tpu_custom_call.1} parent=5 // pred_check
        %p867 = pneg %p866
      $region58: #{tpu_custom_call.1} parent=5 // pred_check_branch
        %869 = sbr.rel (%p867) target = $region60
      $region59: #{tpu_custom_call.1} parent=5 // pred_region
        %s870 = ssub.s32 %s15, 2
        // Predicated region
        $region61: #{tpu_custom_call.1} parent=59 // pred_check
          %p871 = pneg %p173
        $region62: #{tpu_custom_call.1} parent=59 // pred_check_branch
          %873 = sbr.rel (%p871) target = $region64
        $region63: #{tpu_custom_call.1} parent=59 // pred_region
          %s874 = sand.u32 %s158, 1
          %s875 = scalar_lea.sflag [#allocation5], %s874
          %s876 = sand.u32 %s158, 1
          %s877 = smul.addr %s876, 128
          %s878 = scalar_lea.vmem [#allocation6], %s877
          %879 = dma.done %s875, 2048
        $region64: #{tpu_custom_call.1} parent=59 // pred_fallthru
          _
      $region60: #{tpu_custom_call.1} parent=5 // pred_fallthru
        _
    $region6: #{tpu_custom_call.1} parent=1 // loop_footer
      %s19 = sadd.s32 1, %s15
    $region7: #{tpu_custom_call.1} parent=1 // loop_footer_branch
      %14 = sbr.rel target = $region3
    $region8: #{tpu_custom_call.1} parent=1 // loop_exit
      _
    %880 = vsyncpa [#allocation4], 1
    %s881 = scalar_lea.sflag [#allocation4], 1
    %882 = vsyncpa %s881, 1
    %883 = vsyncpa [#allocation5], 1
    %s884 = scalar_lea.sflag [#allocation5], 1
    %885 = vsyncpa %s884, 1

</llo_original>
